<compile_context>
chip_gen: v7x
topology: tpu7x:2x2x1
jax: 0.10.0
libtpu: 0.0.40
codegen_flags: <defaults>
</compile_context>

<pallas_src>
import functools

import jax
import jax.numpy as jnp
from jax.experimental import pallas as pl
from jax.experimental.pallas import tpu as pltpu

_LANES = 128                 # full vreg lane width: unmasked loads/stores
_DEFAULT_BLOCK_ROWS = 16384  # 8 MiB f32 tile (4 MiB bf16); 2 inputs x 2 bufs


def _num_tensorcores() -> int:
    """Best-effort TensorCores-per-chip (2 on v7x-class, 1 on v5e/v6e)."""
    try:
        info = pltpu.get_tpu_info()
        for attr in ("num_cores", "core_count", "num_tensorcores"):
            v = getattr(info, attr, None)
            if v:
                return 2 if int(v) >= 2 else 1
    except Exception:
        pass
    try:
        dev = jax.devices()[0]
        for attr in ("num_cores", "core_count"):
            v = getattr(dev, attr, None)
            if v:
                return 2 if int(v) >= 2 else 1
    except Exception:
        pass
    return 1


def _content_loss_kernel(x_ref, t_ref, out_ref, acc_ref, *,
                         steps, rows, br, needs_mask):
    s = pl.program_id(0)          # parallel slice axis (TensorCore sharding)
    i = pl.program_id(1)          # sequential reduction axis

    @pl.when(i == 0)
    def _():
        acc_ref[...] = jnp.zeros_like(acc_ref)

    d = x_ref[...].astype(jnp.float32) - t_ref[...].astype(jnp.float32)
    sq = d * d

    if needs_mask:
        # Zero out (a) rows past the end of the array in the final partial
        # block and (b) entire clamp-duplicated blocks when blocks_total does
        # not split evenly across slices.  Pure VPU work, hidden under DMA.
        b = s * steps + i                               # true block index
        valid = rows - b * br                           # may be <= 0
        row = jax.lax.broadcasted_iota(jnp.int32, sq.shape, 0)
        sq = jnp.where(row < valid, sq, 0.0)

    if br % 8 == 0:
        # Layout-trivial fold of (br,128) onto the (8,128) accumulator:
        # the leading-axis sum is pure VPU adds (no XLU on the hot path).
        acc_ref[...] += jnp.sum(sq.reshape(br // 8, 8, _LANES), axis=0)
    else:
        # Tiny-input fallback (rows < 8): single cross-sublane reduce.
        acc_ref[0:1, :] += jnp.sum(sq, axis=0, keepdims=True)

    @pl.when(i == pl.num_programs(1) - 1)
    def _():
        out_ref[0, :, :] = acc_ref[...]


def content_loss(x, target, *, block_rows=_DEFAULT_BLOCK_ROWS, num_slices=None):
    """Returns (input_passthrough, loss) matching ContentLoss.forward.

    x, target: (N, C, H, W) arrays of identical shape/dtype.
    """
    assert x.shape == target.shape, (x.shape, target.shape)
    n, c, h, w = x.shape
    numel = n * c * h * w
    # mse = sum_sq / numel ; loss = mse / (4 * H * W * C)
    scale = jnp.float32(
        1.0 / (float(numel) * 4.0 * float(h) * float(w) * float(c)))

    if num_slices is None:
        num_slices = _num_tensorcores()

    itemsize = jnp.dtype(x.dtype).itemsize
    sub_mult = max(8, 32 // max(1, itemsize))   # 8 (f32) / 16 (bf16) / 32 (i8)

    rows = numel // _LANES
    tail = numel % _LANES

    x_flat = x.reshape(-1)
    t_flat = target.reshape(-1)

    # Sub-lane-width tail (< 128 elements) handled in plain JAX.
    tail_sse = jnp.float32(0.0)
    if tail:
        xt = x_flat[rows * _LANES:].astype(jnp.float32)
        tt = t_flat[rows * _LANES:].astype(jnp.float32)
        tail_sse = jnp.sum((xt - tt) * (xt - tt))

    if rows == 0:
        # Degenerate tiny input: nothing for the kernel to do.
        return x, tail_sse * scale

    if tail:
        x2 = jax.lax.slice(x_flat, (0,), (rows * _LANES,)).reshape(rows, _LANES)
        t2 = jax.lax.slice(t_flat, (0,), (rows * _LANES,)).reshape(rows, _LANES)
    else:
        # Common case (numel % 128 == 0): plain reshape, no pad, no extra copy.
        x2 = x_flat.reshape(rows, _LANES)
        t2 = t_flat.reshape(rows, _LANES)

    # ---- tiling ----
    br = min(block_rows, rows)
    if br < rows:
        br = max(sub_mult, (br // sub_mult) * sub_mult)
    blocks_total = pl.cdiv(rows, br)
    ns = max(1, min(int(num_slices), blocks_total))
    steps = pl.cdiv(blocks_total, ns)
    needs_clamp = ns * steps != blocks_total         # at most ns-1 dup blocks
    needs_mask = needs_clamp or (blocks_total * br != rows)

    if needs_clamp:
        def block_index(si, ii):
            return (jnp.minimum(si * steps + ii, blocks_total - 1), 0)
    else:
        def block_index(si, ii):
            return (si * steps + ii, 0)

    # VMEM: 2 inputs x 2 pipeline buffers x tile, plus generous headroom for
    # the accumulator/output and Mosaic internal scratch.
    in_tile_bytes = br * _LANES * itemsize
    vmem_limit = int(4 * in_tile_bytes + (16 << 20))

    kernel = functools.partial(
        _content_loss_kernel, steps=steps, rows=rows, br=br,
        needs_mask=needs_mask)

    partials = pl.pallas_call(
        kernel,
        out_shape=jax.ShapeDtypeStruct((ns, 8, _LANES), jnp.float32),
        grid_spec=pltpu.PrefetchScalarGridSpec(
            num_scalar_prefetch=0,
            grid=(ns, steps),
            in_specs=[
                pl.BlockSpec((br, _LANES), block_index),
                pl.BlockSpec((br, _LANES), block_index),
            ],
            out_specs=pl.BlockSpec((1, 8, _LANES), lambda si, ii: (si, 0, 0)),
            scratch_shapes=[pltpu.VMEM((8, _LANES), jnp.float32)],
        ),
        compiler_params=pltpu.CompilerParams(
            dimension_semantics=("parallel", "arbitrary"),
            vmem_limit_bytes=vmem_limit,
        ),
    )(x2, t2)

    # One tiny final cross-lane reduce (ns*8*128 elements) + scaling.
    loss = (jnp.sum(partials) + tail_sse) * scale

    # The module returns its input unchanged; `self.loss` becomes a second
    # return value instead of a stateful attribute.
    return x, loss


if __name__ == "__main__":
    # Small NCHW feature-map shapes consistent with the module.
    N, C, H, W = 2, 4, 16, 16
    key = jax.random.PRNGKey(0)
    k_x, k_t = jax.random.split(key)
    x = jax.random.normal(k_x, (N, C, H, W), dtype=jnp.float32)
    # Deterministic "target" feature map (plays the role of target.detach()).
    target = jax.random.normal(k_t, (N, C, H, W), dtype=jnp.float32)

    out, loss = content_loss(x, target)
    jax.block_until_ready((out, loss))

    # Reference check in plain JAX (same math as nn.functional.mse_loss).
    ref_loss = jnp.mean((x - target) ** 2) / (4.0 * H * W * C)
    assert jnp.allclose(loss, ref_loss, rtol=1e-5, atol=1e-7), (loss, ref_loss)
    assert jnp.array_equal(out, x)

    print("KERNEL_OK")
</pallas_src>

<mosaic_0001>
module attributes {stable_mosaic.version = 11 : i64} {
  func.func @_content_loss_kernel(%arg0: i32, %arg1: i32, %arg2: memref<16x128xf32, #tpu.memory_space<vmem>>, %arg3: memref<16x128xf32, #tpu.memory_space<vmem>>, %arg4: memref<1x8x128xf32, #tpu.memory_space<vmem>>, %arg5: memref<8x128xf32, #tpu.memory_space<vmem>>) attributes {dimension_semantics = [#tpu.dimension_semantics<parallel>, #tpu.dimension_semantics<arbitrary>], iteration_bounds = array<i64: 1, 1>, scalar_prefetch = 0 : i64, scratch_operands = 1 : i64, tpu.core_type = #tpu.core_type<tc>, window_params = [{transform_indices = @transform_0, window_bounds = array<i64: 16, 128>}, {transform_indices = @transform_1, window_bounds = array<i64: 16, 128>}, {transform_indices = @transform_2, window_bounds = array<i64: 1, 8, 128>}]} {
    %c0_i32 = arith.constant 0 : i32
    %0 = arith.cmpi eq, %arg1, %c0_i32 : i32
    %1 = arith.extui %0 : i1 to i32
    %c0_i32_0 = arith.constant 0 : i32
    %2 = arith.cmpi ne, %1, %c0_i32_0 : i32
    scf.if %2 {
      %cst_10 = arith.constant 0.000000e+00 : f32
      %15 = vector.broadcast %cst_10 : f32 to vector<8x128xf32>
      %c0_11 = arith.constant 0 : index
      %c0_12 = arith.constant 0 : index
      %16 = vector.load %arg5[%c0_11, %c0_12] : memref<8x128xf32, #tpu.memory_space<vmem>>, vector<8x128xf32>
      tpu.vector_store %arg5[%c0_11, %c0_12], %15 {strides = array<i32>} : memref<8x128xf32, #tpu.memory_space<vmem>>, vector<8x128xf32>,
    } else {
    }
    %c0 = arith.constant 0 : index
    %c0_1 = arith.constant 0 : index
    %3 = vector.load %arg2[%c0, %c0_1] : memref<16x128xf32, #tpu.memory_space<vmem>>, vector<16x128xf32>
    %c0_2 = arith.constant 0 : index
    %c0_3 = arith.constant 0 : index
    %4 = vector.load %arg3[%c0_2, %c0_3] : memref<16x128xf32, #tpu.memory_space<vmem>>, vector<16x128xf32>
    %5 = arith.subf %3, %4 : vector<16x128xf32>
    %6 = arith.mulf %5, %5 : vector<16x128xf32>
    %c0_4 = arith.constant 0 : index
    %c0_5 = arith.constant 0 : index
    %7 = vector.load %arg5[%c0_4, %c0_5] : memref<8x128xf32, #tpu.memory_space<vmem>>, vector<8x128xf32>
    %8 = vector.shape_cast %6 : vector<16x128xf32> to vector<2x8x128xf32>
    %cst = arith.constant dense<0.000000e+00> : vector<8x128xf32>
    %9 = vector.multi_reduction <add>, %8, %cst [0] : vector<2x8x128xf32> to vector<8x128xf32>
    %10 = arith.addf %7, %9 : vector<8x128xf32>
    %c0_6 = arith.constant 0 : index
    %c0_7 = arith.constant 0 : index
    %11 = vector.load %arg5[%c0_6, %c0_7] : memref<8x128xf32, #tpu.memory_space<vmem>>, vector<8x128xf32>
    tpu.vector_store %arg5[%c0_6, %c0_7], %10 {strides = array<i32>} : memref<8x128xf32, #tpu.memory_space<vmem>>, vector<8x128xf32>,
    %c0_i32_8 = arith.constant 0 : i32
    %12 = arith.cmpi eq, %arg1, %c0_i32_8 : i32
    %13 = arith.extui %12 : i1 to i32
    %c0_i32_9 = arith.constant 0 : i32
    %14 = arith.cmpi ne, %13, %c0_i32_9 : i32
    scf.if %14 {
      %c0_10 = arith.constant 0 : index
      %c0_11 = arith.constant 0 : index
      %15 = vector.load %arg5[%c0_10, %c0_11] : memref<8x128xf32, #tpu.memory_space<vmem>>, vector<8x128xf32>
      %c0_12 = arith.constant 0 : index
      %c0_13 = arith.constant 0 : index
      %c0_14 = arith.constant 0 : index
      %16 = vector.load %arg4[%c0_12, %c0_13, %c0_14] : memref<1x8x128xf32, #tpu.memory_space<vmem>>, vector<1x8x128xf32>
      %17 = vector.shape_cast %16 : vector<1x8x128xf32> to vector<8x128xf32>
      %18 = vector.shape_cast %15 : vector<8x128xf32> to vector<1x8x128xf32>
      tpu.vector_store %arg4[%c0_12, %c0_13, %c0_14], %18 {strides = array<i32>} : memref<1x8x128xf32, #tpu.memory_space<vmem>>, vector<1x8x128xf32>,
    } else {
    }
    return
  }
  func.func @transform_0(%arg0: i32, %arg1: i32) -> (i32, i32) {
    %c1_i32 = arith.constant 1 : i32
    %0 = arith.muli %arg0, %c1_i32 : i32
    %1 = arith.addi %0, %arg1 : i32
    %c0_i32 = arith.constant 0 : i32
    %c0_i32_0 = arith.constant 0 : i32
    return %1, %c0_i32 : i32, i32
  }
  func.func @transform_1(%arg0: i32, %arg1: i32) -> (i32, i32) {
    %c1_i32 = arith.constant 1 : i32
    %0 = arith.muli %arg0, %c1_i32 : i32
    %1 = arith.addi %0, %arg1 : i32
    %c0_i32 = arith.constant 0 : i32
    %c0_i32_0 = arith.constant 0 : i32
    return %1, %c0_i32 : i32, i32
  }
  func.func @transform_2(%arg0: i32, %arg1: i32) -> (i32, i32, i32) {
    %c0_i32 = arith.constant 0 : i32
    %c0_i32_0 = arith.constant 0 : i32
    %c0_i32_1 = arith.constant 0 : i32
    return %arg0, %c0_i32, %c0_i32_0 : i32, i32, i32
  }
}

</mosaic_0001>

<llo_original>
// kernel: tpu_custom_call.1
$region0: #{tpu_custom_call.1}
  #allocation0 [shape = 'u32[]', space=smem, size = 0x4, offset = 0x4, fixed_abs, tag = 'smem constant byte address 0x4 - core index']
  #allocation1 [shape = 'u32[144,128]{1,0:T(1,128)}', space=vmem, size = 0x12000, scoped, tag = 'internal scratch']
  #allocation2 [shape = 'f32[8,128]{1,0:T(8,128)}', space=vmem, size = 0x1000, scoped, tag = 'scratch operand']
  %s0 = inlined_call_operand.hbm [shape: f32[16,128], index: 0, kind: input, shape index: {}]
  %s1 = inlined_call_operand.hbm [shape: f32[16,128], index: 1, kind: input, shape index: {}]
  %s2 = inlined_call_operand.hbm [shape: f32[1,8,128], index: 2, kind: output, shape index: {}]
  %s3 = sld [smem:[#allocation0]]
  $region34: #{tpu_custom_call.1} parent=0
    _
  %s5 = ssub.s32 1, %s3
  %s6 = scalar_select 0, %s5, %s3
  $region1: #{tpu_custom_call.1} parent=0
    #allocation3 [shape = 'u8[8192]{0}', space=vmem, size = 0x2000, scoped, tag = 'input window, operand 0, single buffered']
    #allocation4 [shape = 's32[1]{0}', space=sflag, size = 0x4, scoped, tag = 'scoped memory for tpu_custom_call.1']
    #allocation5 [shape = 's32[1]{0}', space=sflag, size = 0x4, scoped, tag = 'scoped memory for tpu_custom_call.1']
    #allocation6 [shape = 'u8[8192]{0}', space=vmem, size = 0x2000, scoped, tag = 'input window, operand 1, single buffered']
    #allocation7 [shape = 's32[1]{0}', space=sflag, size = 0x4, scoped, tag = 'scoped memory for tpu_custom_call.1']
    #allocation8 [shape = 'u8[4096]{0}', space=vmem, size = 0x1000, scoped, tag = 'output window, operand 0, single buffered']
    %7 = vsyncpa [#allocation4], 0
    %8 = vsyncpa [#allocation7], 0
    %9 = vsyncpa [#allocation5], 0
    // Predicated region
    $region2: #{tpu_custom_call.1} parent=1 // pred_check
      _
    $region3: #{tpu_custom_call.1} parent=1 // pred_check_branch
      %11 = sbr.rel (0) target = $region5
    $region4: #{tpu_custom_call.1} parent=1 // pred_region
      %s12 = sadd.s32 0, 0
      %s13 = smul.u32 2, %s12
      %s15 = ssub.s32 256, 256
      %16 = vsyncadd [#allocation4], %s15
      %s17 = smul.addr %s13, 128
      %s18 = scalar_lea.hbm %s0, %s17
      %s19 = sshll.u32 [#allocation3], 4
      %s20 = int_to_ptr.vmem [resolvable:$true] %s19
      %25 = dma.hbm_to_vmem [thread:$0]  %s18, 256, %s20, [#allocation4], 128, 128, 8
    $region5: #{tpu_custom_call.1} parent=1 // pred_fallthru
      _
    // Predicated region
    $region6: #{tpu_custom_call.1} parent=1 // pred_check
      _
    $region7: #{tpu_custom_call.1} parent=1 // pred_check_branch
      %27 = sbr.rel (0) target = $region9
    $region8: #{tpu_custom_call.1} parent=1 // pred_region
      %s28 = sadd.s32 0, 0
      %s29 = smul.u32 2, %s28
      %s31 = ssub.s32 256, 256
      %32 = vsyncadd [#allocation7], %s31
      %s33 = smul.addr %s29, 128
      %s34 = scalar_lea.hbm %s1, %s33
      %s35 = sshll.u32 [#allocation6], 4
      %s36 = int_to_ptr.vmem [resolvable:$true] %s35
      %41 = dma.hbm_to_vmem [thread:$0]  %s34, 256, %s36, [#allocation7], 128, 128, 8
    $region9: #{tpu_custom_call.1} parent=1 // pred_fallthru
      _
    // Predicated region
    $region10: #{tpu_custom_call.1} parent=1 // pred_check
      _
    $region11: #{tpu_custom_call.1} parent=1 // pred_check_branch
      %43 = sbr.rel (0) target = $region13
    $region12: #{tpu_custom_call.1} parent=1 // pred_region
      %44 = dma.done [#allocation4], 256
    $region13: #{tpu_custom_call.1} parent=1 // pred_fallthru
      _
    // Predicated region
    $region14: #{tpu_custom_call.1} parent=1 // pred_check
      _
    $region15: #{tpu_custom_call.1} parent=1 // pred_check_branch
      %46 = sbr.rel (0) target = $region17
    $region16: #{tpu_custom_call.1} parent=1 // pred_region
      %47 = dma.done [#allocation7], 256
    $region17: #{tpu_custom_call.1} parent=1 // pred_fallthru
      _
    %s48 = sadd.s32 0, 0
    %s49 = smul.u32 2, %s48
    %s50 = sadd.s32 0, 0
    %s51 = smul.u32 2, %s50
    %p52 = scmp.eq.s32.totalorder 0, 0
    // Predicated region
    $region18: #{tpu_custom_call.1} parent=1 // pred_check
      %p53 = pneg %p52
    $region19: #{tpu_custom_call.1} parent=1 // pred_check_branch
      %55 = sbr.rel (%p53) target = $region21
    $region20: #{tpu_custom_call.1} parent=1 // pred_region
      %56 = vst [vmem:[#allocation2] sm:$0xff] 0.0
    $region21: #{tpu_custom_call.1} parent=1 // pred_fallthru
      _
    %v57 = vld [vmem:[#allocation3] sm:$0xff]
    %v58 = vld [vmem:[#allocation3 + $0x8] sm:$0xff]
    %v59 = vld [vmem:[#allocation6] sm:$0xff]
    %v60 = vld [vmem:[#allocation6 + $0x8] sm:$0xff]
    %v61 = vsub.f32 %v57, %v59
    %v62 = vsub.f32 %v58, %v60
    %v63 = vmul.f32 %v61, %v61
    %v64 = vmul.f32 %v62, %v62
    %v65 = vld [vmem:[#allocation2] sm:$0xff]
    %v66 = vadd.f32 %v63, %v64
    %v67 = vadd.f32 %v65, %v66
    %68 = vst [vmem:[#allocation2] sm:$0xff] %v67
    // Predicated region
    $region22: #{tpu_custom_call.1} parent=1 // pred_check
      %p69 = pneg %p52
    $region23: #{tpu_custom_call.1} parent=1 // pred_check_branch
      %71 = sbr.rel (%p69) target = $region25
    $region24: #{tpu_custom_call.1} parent=1 // pred_region
      %v72 = vld [vmem:[#allocation2] sm:$0xff]
      %73 = vst [vmem:[#allocation8] sm:$0xff] %v72
    $region25: #{tpu_custom_call.1} parent=1 // pred_fallthru
      _
    // Predicated region
    $region26: #{tpu_custom_call.1} parent=1 // pred_check
      _
    $region27: #{tpu_custom_call.1} parent=1 // pred_check_branch
      %75 = sbr.rel (0) target = $region29
    $region28: #{tpu_custom_call.1} parent=1 // pred_region
      %s77 = ssub.s32 128, 128
      %78 = vsyncadd [#allocation5], %s77
      %s80 = sshll.u32 [#allocation8], 4
      %s81 = int_to_ptr.vmem [resolvable:$true] %s80
      %83 = dma.vmem_to_hbm [thread:$0]  %s81, 128, %s2, [#allocation5]
    $region29: #{tpu_custom_call.1} parent=1 // pred_fallthru
      _
    // Predicated region
    $region30: #{tpu_custom_call.1} parent=1 // pred_check
      _
    $region31: #{tpu_custom_call.1} parent=1 // pred_check_branch
      %85 = sbr.rel (0) target = $region33
    $region32: #{tpu_custom_call.1} parent=1 // pred_region
      %86 = dma.done [#allocation5], 128
    $region33: #{tpu_custom_call.1} parent=1 // pred_fallthru
      _
    %87 = vsyncpa [#allocation4], 1
    %88 = vsyncpa [#allocation7], 1
    %89 = vsyncpa [#allocation5], 1

</llo_original>
